<compile_context>
chip_gen: v5e
topology: v5e:2x2
jax: 0.10.0
libtpu: 0.0.40
codegen_flags: <defaults>
</compile_context>

<pallas_src>
import jax
import jax.numpy as jnp
from jax.experimental import pallas as pl
from jax.experimental.pallas import tpu as pltpu


def _grad_loss_kernel(p_ref, t_ref, sdx_ref, sdy_ref):
    # One (Bt, H, W) slab of planes per grid step, accumulated in f32.
    d = p_ref[...].astype(jnp.float32) - t_ref[...].astype(jnp.float32)

    dx = jnp.abs(d[:, :, :-1] - d[:, :, 1:])   # (Bt, H, W-1)
    dy = jnp.abs(d[:, :-1, :] - d[:, 1:, :])   # (Bt, H-1, W)

    sdx = jnp.sum(dx)
    sdy = jnp.sum(dy)

    # Lane-dense (full 128-wide) per-tile partial-sum rows -> unmasked stores.
    sdx_ref[...] = jnp.broadcast_to(sdx, (1, 1, 128)).astype(jnp.float32)
    sdy_ref[...] = jnp.broadcast_to(sdy, (1, 1, 128)).astype(jnp.float32)


def _pick_bt(B, plane_bytes, budget_bytes):
    """Largest divisor of B whose block fits in budget (avoids padding)."""
    max_bt = int(max(1, min(B, budget_bytes // max(plane_bytes, 1))))
    for bt in range(max_bt, 0, -1):
        if B % bt == 0:
            return bt
    return 1


def gradient_loss(pred, target):
    """pred, target: (N, C, H, W). Returns scalar f32 loss."""
    N, C, H, W = pred.shape
    assert target.shape == pred.shape
    B = N * C
    p = pred.reshape(B, H, W)
    t = target.reshape(B, H, W)

    itemsize = jnp.dtype(pred.dtype).itemsize
    plane_bytes = H * W * itemsize
    Bt = _pick_bt(B, plane_bytes, 2 * 1024 * 1024)
    num_tiles = B // Bt

    block_bytes = Bt * plane_bytes
    # 2 inputs x 2 pipeline buffers + ~3 f32 intermediates, with headroom.
    vmem_limit = int(min(128 * 1024 * 1024,
                         max(32 * 1024 * 1024, 10 * block_bytes)))

    flops = 7 * B * H * W
    bytes_accessed = 2 * B * H * W * itemsize + num_tiles * 2 * 128 * 4

    sum_dx, sum_dy = pl.pallas_call(
        _grad_loss_kernel,
        out_shape=(
            jax.ShapeDtypeStruct((num_tiles, 1, 128), jnp.float32),
            jax.ShapeDtypeStruct((num_tiles, 1, 128), jnp.float32),
        ),
        grid_spec=pltpu.PrefetchScalarGridSpec(
            num_scalar_prefetch=0,
            grid=(num_tiles,),
            in_specs=[
                pl.BlockSpec((Bt, H, W), lambda b: (b, 0, 0)),
                pl.BlockSpec((Bt, H, W), lambda b: (b, 0, 0)),
            ],
            out_specs=[
                pl.BlockSpec((1, 1, 128), lambda b: (b, 0, 0)),
                pl.BlockSpec((1, 1, 128), lambda b: (b, 0, 0)),
            ],
        ),
        compiler_params=pltpu.CompilerParams(
            dimension_semantics=("parallel",),   # independent tiles -> megacore
            vmem_limit_bytes=vmem_limit,
        ),
        cost_estimate=pl.CostEstimate(
            flops=flops, transcendentals=0, bytes_accessed=bytes_accessed),
    )(p, t)

    loss_dx = jnp.sum(sum_dx[:, 0, 0]) / jnp.float32(B * H * (W - 1))
    loss_dy = jnp.sum(sum_dy[:, 0, 0]) / jnp.float32(B * (H - 1) * W)
    return loss_dx + loss_dy


def _gradient_loss_ref(pred, target):
    # Pure-JAX reference mirroring the PyTorch module exactly.
    p_dx = pred[:, :, :, :-1] - pred[:, :, :, 1:]
    p_dy = pred[:, :, :-1, :] - pred[:, :, 1:, :]
    t_dx = target[:, :, :, :-1] - target[:, :, :, 1:]
    t_dy = target[:, :, :-1, :] - target[:, :, 1:, :]
    return jnp.mean(jnp.abs(p_dx - t_dx)) + jnp.mean(jnp.abs(p_dy - t_dy))


if __name__ == "__main__":
    key = jax.random.PRNGKey(0)
    k1, k2 = jax.random.split(key)
    N, C, H, W = 2, 4, 16, 16
    pred = jax.random.normal(k1, (N, C, H, W), dtype=jnp.float32)
    target = jax.random.normal(k2, (N, C, H, W), dtype=jnp.float32)

    out = jax.block_until_ready(gradient_loss(pred, target))
    ref = jax.block_until_ready(_gradient_loss_ref(pred, target))

    assert jnp.allclose(out, ref, rtol=1e-5, atol=1e-5), (out, ref)
    print("KERNEL_OK")
</pallas_src>

<mosaic_0001>
module attributes {stable_mosaic.version = 11 : i64} {
  func.func @_grad_loss_kernel(%arg0: i32, %arg1: memref<8x16x16xf32, #tpu.memory_space<vmem>>, %arg2: memref<8x16x16xf32, #tpu.memory_space<vmem>>, %arg3: memref<1x1x128xf32, #tpu.memory_space<vmem>>, %arg4: memref<1x1x128xf32, #tpu.memory_space<vmem>>) attributes {dimension_semantics = [#tpu.dimension_semantics<parallel>], iteration_bounds = array<i64: 1>, scalar_prefetch = 0 : i64, scratch_operands = 0 : i64, tpu.core_type = #tpu.core_type<tc>, window_params = [{transform_indices = @transform_0, window_bounds = array<i64: 8, 16, 16>}, {transform_indices = @transform_1, window_bounds = array<i64: 8, 16, 16>}, {transform_indices = @transform_2, window_bounds = array<i64: 1, 1, 128>}, {transform_indices = @transform_3, window_bounds = array<i64: 1, 1, 128>}]} {
    %c0 = arith.constant 0 : index
    %c0_0 = arith.constant 0 : index
    %c0_1 = arith.constant 0 : index
    %0 = vector.load %arg1[%c0, %c0_0, %c0_1] : memref<8x16x16xf32, #tpu.memory_space<vmem>>, vector<8x16x16xf32>
    %c0_2 = arith.constant 0 : index
    %c0_3 = arith.constant 0 : index
    %c0_4 = arith.constant 0 : index
    %1 = vector.load %arg2[%c0_2, %c0_3, %c0_4] : memref<8x16x16xf32, #tpu.memory_space<vmem>>, vector<8x16x16xf32>
    %2 = arith.subf %0, %1 : vector<8x16x16xf32>
    %3 = vector.extract_strided_slice %2 {offsets = [0, 0, 0], sizes = [8, 16, 15], strides = [1, 1, 1]} : vector<8x16x16xf32> to vector<8x16x15xf32>
    %4 = vector.extract_strided_slice %2 {offsets = [0, 0, 1], sizes = [8, 16, 15], strides = [1, 1, 1]} : vector<8x16x16xf32> to vector<8x16x15xf32>
    %5 = arith.subf %3, %4 : vector<8x16x15xf32>
    %6 = math.absf %5 : vector<8x16x15xf32>
    %7 = vector.extract_strided_slice %2 {offsets = [0, 0, 0], sizes = [8, 15, 16], strides = [1, 1, 1]} : vector<8x16x16xf32> to vector<8x15x16xf32>
    %8 = vector.extract_strided_slice %2 {offsets = [0, 1, 0], sizes = [8, 15, 16], strides = [1, 1, 1]} : vector<8x16x16xf32> to vector<8x15x16xf32>
    %9 = arith.subf %7, %8 : vector<8x15x16xf32>
    %10 = math.absf %9 : vector<8x15x16xf32>
    %11 = vector.shape_cast %6 : vector<8x16x15xf32> to vector<1x8x16x15xf32>
    %cst = arith.constant dense<0.000000e+00> : vector<1xf32>
    %12 = vector.multi_reduction <add>, %11, %cst [1, 2, 3] : vector<1x8x16x15xf32> to vector<1xf32>
    %13 = vector.shape_cast %12 : vector<1xf32> to vector<1x1x1x1xf32>
    %14 = vector.extract %13[0, 0, 0, 0] : f32 from vector<1x1x1x1xf32>
    %15 = vector.shape_cast %10 : vector<8x15x16xf32> to vector<1x8x15x16xf32>
    %cst_5 = arith.constant dense<0.000000e+00> : vector<1xf32>
    %16 = vector.multi_reduction <add>, %15, %cst_5 [1, 2, 3] : vector<1x8x15x16xf32> to vector<1xf32>
    %17 = vector.shape_cast %16 : vector<1xf32> to vector<1x1x1x1xf32>
    %18 = vector.extract %17[0, 0, 0, 0] : f32 from vector<1x1x1x1xf32>
    %19 = vector.broadcast %14 : f32 to vector<1x1x128xf32>
    %c0_6 = arith.constant 0 : index
    %c0_7 = arith.constant 0 : index
    %c0_8 = arith.constant 0 : index
    %20 = vector.load %arg3[%c0_6, %c0_7, %c0_8] : memref<1x1x128xf32, #tpu.memory_space<vmem>>, vector<1x1x128xf32>
    tpu.vector_store %arg3[%c0_6, %c0_7, %c0_8], %19 {strides = array<i32>} : memref<1x1x128xf32, #tpu.memory_space<vmem>>, vector<1x1x128xf32>,
    %21 = vector.broadcast %18 : f32 to vector<1x1x128xf32>
    %c0_9 = arith.constant 0 : index
    %c0_10 = arith.constant 0 : index
    %c0_11 = arith.constant 0 : index
    %22 = vector.load %arg4[%c0_9, %c0_10, %c0_11] : memref<1x1x128xf32, #tpu.memory_space<vmem>>, vector<1x1x128xf32>
    tpu.vector_store %arg4[%c0_9, %c0_10, %c0_11], %21 {strides = array<i32>} : memref<1x1x128xf32, #tpu.memory_space<vmem>>, vector<1x1x128xf32>,
    return
  }
  func.func @transform_0(%arg0: i32) -> (i32, i32, i32) {
    %c0_i32 = arith.constant 0 : i32
    %c0_i32_0 = arith.constant 0 : i32
    %c0_i32_1 = arith.constant 0 : i32
    return %arg0, %c0_i32, %c0_i32_0 : i32, i32, i32
  }
  func.func @transform_1(%arg0: i32) -> (i32, i32, i32) {
    %c0_i32 = arith.constant 0 : i32
    %c0_i32_0 = arith.constant 0 : i32
    %c0_i32_1 = arith.constant 0 : i32
    return %arg0, %c0_i32, %c0_i32_0 : i32, i32, i32
  }
  func.func @transform_2(%arg0: i32) -> (i32, i32, i32) {
    %c0_i32 = arith.constant 0 : i32
    %c0_i32_0 = arith.constant 0 : i32
    %c0_i32_1 = arith.constant 0 : i32
    return %arg0, %c0_i32, %c0_i32_0 : i32, i32, i32
  }
  func.func @transform_3(%arg0: i32) -> (i32, i32, i32) {
    %c0_i32 = arith.constant 0 : i32
    %c0_i32_0 = arith.constant 0 : i32
    %c0_i32_1 = arith.constant 0 : i32
    return %arg0, %c0_i32, %c0_i32_0 : i32, i32, i32
  }
}

</mosaic_0001>

<llo_original>
// kernel: tpu_custom_call.1
$region0: #{tpu_custom_call.1}
  #allocation0 [shape = 'u32[]', space=smem, size = 0x4, offset = 0x4, fixed_abs, tag = 'smem constant byte address 0x4 - core index']
  #allocation1 [shape = 'u32[72,128]{1,0:T(1,128)}', space=vmem, size = 0x9000, scoped, tag = 'internal scratch']
  %s0 = inlined_call_operand.hbm [shape: f32[8,16,16], index: 0, kind: input, shape index: {}]
  %s1 = inlined_call_operand.hbm [shape: f32[8,16,16], index: 1, kind: input, shape index: {}]
  %s2 = inlined_call_operand.hbm [shape: f32[1,1,128], index: 2, kind: output, shape index: {0}]
  %s3 = inlined_call_operand.hbm [shape: f32[1,1,128], index: 3, kind: output, shape index: {1}]
  %4 = xla_tuple %s2, %s3
  %s5 = sld [smem:[#allocation0]]
  $region34: #{tpu_custom_call.1} parent=0
    _
  %s7 = ssub.s32 1, %s5
  %s8 = scalar_select 0, %s7, %s5
  $region1: #{tpu_custom_call.1} parent=0
    #allocation2 [shape = 'u8[65536]{0}', space=vmem, size = 0x10000, scoped, tag = 'input window, operand 0, single buffered']
    #allocation3 [shape = 's32[1]{0}', space=sflag, size = 0x4, scoped, tag = 'scoped memory for tpu_custom_call.1']
    #allocation4 [shape = 's32[1]{0}', space=sflag, size = 0x4, scoped, tag = 'scoped memory for tpu_custom_call.1']
    #allocation5 [shape = 'u8[65536]{0}', space=vmem, size = 0x10000, scoped, tag = 'input window, operand 1, single buffered']
    #allocation6 [shape = 's32[1]{0}', space=sflag, size = 0x4, scoped, tag = 'scoped memory for tpu_custom_call.1']
    #allocation7 [shape = 'u8[512]{0}', space=vmem, size = 0x400, scoped, tag = 'output window, operand 0, single buffered']
    #allocation8 [shape = 'u8[512]{0}', space=vmem, size = 0x400, scoped, tag = 'output window, operand 1, single buffered']
    #allocation9 [shape = 's32[1]{0}', space=sflag, size = 0x4, scoped, tag = 'scoped memory for tpu_custom_call.1']
    %9 = vsyncpa [#allocation3], 0
    %10 = vsyncpa [#allocation6], 0
    %11 = vsyncpa [#allocation4], 0
    %12 = vsyncpa [#allocation9], 0
    // Predicated region
    $region2: #{tpu_custom_call.1} parent=1 // pred_check
      _
    $region3: #{tpu_custom_call.1} parent=1 // pred_check_branch
      %14 = sbr.rel (0) target = $region5
    $region4: #{tpu_custom_call.1} parent=1 // pred_region
      %16 = vsyncadd [#allocation3], 0
      %s17 = sshll.u32 %s0, 4
      %s18 = int_to_ptr.hbm [resolvable:$true] %s17
      %s19 = sshll.u32 [#allocation2], 4
      %s20 = int_to_ptr.vmem [resolvable:$true] %s19
      %25 = dma.hbm_to_vmem [thread:$0]  %s18, 2048, %s20, [#allocation3], 128, 128, 8
    $region5: #{tpu_custom_call.1} parent=1 // pred_fallthru
      _
    // Predicated region
    $region6: #{tpu_custom_call.1} parent=1 // pred_check
      _
    $region7: #{tpu_custom_call.1} parent=1 // pred_check_branch
      %27 = sbr.rel (0) target = $region9
    $region8: #{tpu_custom_call.1} parent=1 // pred_region
      %29 = vsyncadd [#allocation6], 0
      %s30 = sshll.u32 %s1, 4
      %s31 = int_to_ptr.hbm [resolvable:$true] %s30
      %s32 = sshll.u32 [#allocation5], 4
      %s33 = int_to_ptr.vmem [resolvable:$true] %s32
      %38 = dma.hbm_to_vmem [thread:$0]  %s31, 2048, %s33, [#allocation6], 128, 128, 8
    $region9: #{tpu_custom_call.1} parent=1 // pred_fallthru
      _
    // Predicated region
    $region10: #{tpu_custom_call.1} parent=1 // pred_check
      _
    $region11: #{tpu_custom_call.1} parent=1 // pred_check_branch
      %40 = sbr.rel (0) target = $region13
    $region12: #{tpu_custom_call.1} parent=1 // pred_region
      %42 = dma.done [#allocation3], 2048
    $region13: #{tpu_custom_call.1} parent=1 // pred_fallthru
      _
    // Predicated region
    $region14: #{tpu_custom_call.1} parent=1 // pred_check
      _
    $region15: #{tpu_custom_call.1} parent=1 // pred_check_branch
      %44 = sbr.rel (0) target = $region17
    $region16: #{tpu_custom_call.1} parent=1 // pred_region
      %46 = dma.done [#allocation6], 2048
    $region17: #{tpu_custom_call.1} parent=1 // pred_fallthru
      _
    %v47 = vld [vmem:[#allocation2] sm:$0xff]
    %v48 = vld [vmem:[#allocation2 + $0x8] sm:$0xff]
    %v49 = vld [vmem:[#allocation2 + $0x10] sm:$0xff]
    %v50 = vld [vmem:[#allocation2 + $0x18] sm:$0xff]
    %v51 = vld [vmem:[#allocation2 + $0x20] sm:$0xff]
    %v52 = vld [vmem:[#allocation2 + $0x28] sm:$0xff]
    %v53 = vld [vmem:[#allocation2 + $0x30] sm:$0xff]
    %v54 = vld [vmem:[#allocation2 + $0x38] sm:$0xff]
    %v55 = vld [vmem:[#allocation2 + $0x40] sm:$0xff]
    %v56 = vld [vmem:[#allocation2 + $0x48] sm:$0xff]
    %v57 = vld [vmem:[#allocation2 + $0x50] sm:$0xff]
    %v58 = vld [vmem:[#allocation2 + $0x58] sm:$0xff]
    %v59 = vld [vmem:[#allocation2 + $0x60] sm:$0xff]
    %v60 = vld [vmem:[#allocation2 + $0x68] sm:$0xff]
    %v61 = vld [vmem:[#allocation2 + $0x70] sm:$0xff]
    %v62 = vld [vmem:[#allocation2 + $0x78] sm:$0xff]
    %v63 = vld [vmem:[#allocation5] sm:$0xff]
    %v64 = vld [vmem:[#allocation5 + $0x8] sm:$0xff]
    %v65 = vld [vmem:[#allocation5 + $0x10] sm:$0xff]
    %v66 = vld [vmem:[#allocation5 + $0x18] sm:$0xff]
    %v67 = vld [vmem:[#allocation5 + $0x20] sm:$0xff]
    %v68 = vld [vmem:[#allocation5 + $0x28] sm:$0xff]
    %v69 = vld [vmem:[#allocation5 + $0x30] sm:$0xff]
    %v70 = vld [vmem:[#allocation5 + $0x38] sm:$0xff]
    %v71 = vld [vmem:[#allocation5 + $0x40] sm:$0xff]
    %v72 = vld [vmem:[#allocation5 + $0x48] sm:$0xff]
    %v73 = vld [vmem:[#allocation5 + $0x50] sm:$0xff]
    %v74 = vld [vmem:[#allocation5 + $0x58] sm:$0xff]
    %v75 = vld [vmem:[#allocation5 + $0x60] sm:$0xff]
    %v76 = vld [vmem:[#allocation5 + $0x68] sm:$0xff]
    %v77 = vld [vmem:[#allocation5 + $0x70] sm:$0xff]
    %v78 = vld [vmem:[#allocation5 + $0x78] sm:$0xff]
    %v79 = vsub.f32 %v47, %v63
    %v80 = vsub.f32 %v48, %v64
    %v81 = vsub.f32 %v49, %v65
    %v82 = vsub.f32 %v50, %v66
    %v83 = vsub.f32 %v51, %v67
    %v84 = vsub.f32 %v52, %v68
    %v85 = vsub.f32 %v53, %v69
    %v86 = vsub.f32 %v54, %v70
    %v87 = vsub.f32 %v55, %v71
    %v88 = vsub.f32 %v56, %v72
    %v89 = vsub.f32 %v57, %v73
    %v90 = vsub.f32 %v58, %v74
    %v91 = vsub.f32 %v59, %v75
    %v92 = vsub.f32 %v60, %v76
    %v93 = vsub.f32 %v61, %v77
    %v94 = vsub.f32 %v62, %v78
    %111 = vrot.lane.b32.xlu0 %v79, 127
    %v112 = vpop.permute.xlu0 %111
    %113 = vrot.lane.b32.xlu0 %v80, 127
    %v114 = vpop.permute.xlu0 %113
    %115 = vrot.lane.b32.xlu0 %v81, 127
    %v116 = vpop.permute.xlu0 %115
    %117 = vrot.lane.b32.xlu0 %v82, 127
    %v118 = vpop.permute.xlu0 %117
    %119 = vrot.lane.b32.xlu0 %v83, 127
    %v120 = vpop.permute.xlu0 %119
    %121 = vrot.lane.b32.xlu0 %v84, 127
    %v122 = vpop.permute.xlu0 %121
    %123 = vrot.lane.b32.xlu0 %v85, 127
    %v124 = vpop.permute.xlu0 %123
    %125 = vrot.lane.b32.xlu0 %v86, 127
    %v126 = vpop.permute.xlu0 %125
    %127 = vrot.lane.b32.xlu0 %v87, 127
    %v128 = vpop.permute.xlu0 %127
    %129 = vrot.lane.b32.xlu0 %v88, 127
    %v130 = vpop.permute.xlu0 %129
    %131 = vrot.lane.b32.xlu0 %v89, 127
    %v132 = vpop.permute.xlu0 %131
    %133 = vrot.lane.b32.xlu0 %v90, 127
    %v134 = vpop.permute.xlu0 %133
    %135 = vrot.lane.b32.xlu0 %v91, 127
    %v136 = vpop.permute.xlu0 %135
    %137 = vrot.lane.b32.xlu0 %v92, 127
    %v138 = vpop.permute.xlu0 %137
    %139 = vrot.lane.b32.xlu0 %v93, 127
    %v140 = vpop.permute.xlu0 %139
    %141 = vrot.lane.b32.xlu0 %v94, 127
    %v142 = vpop.permute.xlu0 %141
    %v159 = vsub.f32 %v79, %v112
    %v160 = vsub.f32 %v80, %v114
    %v161 = vsub.f32 %v81, %v116
    %v162 = vsub.f32 %v82, %v118
    %v163 = vsub.f32 %v83, %v120
    %v164 = vsub.f32 %v84, %v122
    %v165 = vsub.f32 %v85, %v124
    %v166 = vsub.f32 %v86, %v126
    %v167 = vsub.f32 %v87, %v128
    %v168 = vsub.f32 %v88, %v130
    %v169 = vsub.f32 %v89, %v132
    %v170 = vsub.f32 %v90, %v134
    %v171 = vsub.f32 %v91, %v136
    %v172 = vsub.f32 %v92, %v138
    %v173 = vsub.f32 %v93, %v140
    %v174 = vsub.f32 %v94, %v142
    %v175 = vand.u32 2147483647, %v159
    %v176 = vand.u32 2147483647, %v160
    %v177 = vand.u32 2147483647, %v161
    %v178 = vand.u32 2147483647, %v162
    %v179 = vand.u32 2147483647, %v163
    %v180 = vand.u32 2147483647, %v164
    %v181 = vand.u32 2147483647, %v165
    %v182 = vand.u32 2147483647, %v166
    %v183 = vand.u32 2147483647, %v167
    %v184 = vand.u32 2147483647, %v168
    %v185 = vand.u32 2147483647, %v169
    %v186 = vand.u32 2147483647, %v170
    %v187 = vand.u32 2147483647, %v171
    %v188 = vand.u32 2147483647, %v172
    %v189 = vand.u32 2147483647, %v173
    %v190 = vand.u32 2147483647, %v174
    %vm191 = vcmask 1046528
    %v192 = vrot.slane %v79, 1
    %v193 = vrot.slane %v80, 1
    %v194 = vsel %vm191, %v192, %v193
    %v195 = vrot.slane %v81, 1
    %v196 = vrot.slane %v82, 1
    %v197 = vsel %vm191, %v195, %v196
    %v198 = vrot.slane %v83, 1
    %v199 = vrot.slane %v84, 1
    %v200 = vsel %vm191, %v198, %v199
    %v201 = vrot.slane %v85, 1
    %v202 = vrot.slane %v86, 1
    %v203 = vsel %vm191, %v201, %v202
    %v204 = vrot.slane %v87, 1
    %v205 = vrot.slane %v88, 1
    %v206 = vsel %vm191, %v204, %v205
    %v207 = vrot.slane %v89, 1
    %v208 = vrot.slane %v90, 1
    %v209 = vsel %vm191, %v207, %v208
    %v210 = vrot.slane %v91, 1
    %v211 = vrot.slane %v92, 1
    %v212 = vsel %vm191, %v210, %v211
    %v213 = vrot.slane %v93, 1
    %v214 = vrot.slane %v94, 1
    %v215 = vsel %vm191, %v213, %v214
    %v232 = vsub.f32 %v79, %v194
    %v233 = vsub.f32 %v80, %v193
    %v234 = vsub.f32 %v81, %v197
    %v235 = vsub.f32 %v82, %v196
    %v236 = vsub.f32 %v83, %v200
    %v237 = vsub.f32 %v84, %v199
    %v238 = vsub.f32 %v85, %v203
    %v239 = vsub.f32 %v86, %v202
    %v240 = vsub.f32 %v87, %v206
    %v241 = vsub.f32 %v88, %v205
    %v242 = vsub.f32 %v89, %v209
    %v243 = vsub.f32 %v90, %v208
    %v244 = vsub.f32 %v91, %v212
    %v245 = vsub.f32 %v92, %v211
    %v246 = vsub.f32 %v93, %v215
    %v247 = vsub.f32 %v94, %v214
    %v248 = vand.u32 2147483647, %v232
    %v249 = vand.u32 2147483647, %v233
    %v250 = vand.u32 2147483647, %v234
    %v251 = vand.u32 2147483647, %v235
    %v252 = vand.u32 2147483647, %v236
    %v253 = vand.u32 2147483647, %v237
    %v254 = vand.u32 2147483647, %v238
    %v255 = vand.u32 2147483647, %v239
    %v256 = vand.u32 2147483647, %v240
    %v257 = vand.u32 2147483647, %v241
    %v258 = vand.u32 2147483647, %v242
    %v259 = vand.u32 2147483647, %v243
    %v260 = vand.u32 2147483647, %v244
    %v261 = vand.u32 2147483647, %v245
    %v262 = vand.u32 2147483647, %v246
    %v263 = vand.u32 2147483647, %v247
    %vm264 = vcmask 121856
    %v265 = vsel %vm264, %v175, 0.0
    %v266 = vsel %vm264, %v176, 0.0
    %v267 = vadd.f32 %v265, %v266
    %v268 = vsel %vm264, %v177, 0.0
    %v269 = vadd.f32 %v267, %v268
    %v270 = vsel %vm264, %v178, 0.0
    %v271 = vadd.f32 %v269, %v270
    %v272 = vsel %vm264, %v179, 0.0
    %v273 = vadd.f32 %v271, %v272
    %v274 = vsel %vm264, %v180, 0.0
    %v275 = vadd.f32 %v273, %v274
    %v276 = vsel %vm264, %v181, 0.0
    %v277 = vadd.f32 %v275, %v276
    %v278 = vsel %vm264, %v182, 0.0
    %v279 = vadd.f32 %v277, %v278
    %v280 = vsel %vm264, %v183, 0.0
    %v281 = vadd.f32 %v279, %v280
    %v282 = vsel %vm264, %v184, 0.0
    %v283 = vadd.f32 %v281, %v282
    %v284 = vsel %vm264, %v185, 0.0
    %v285 = vadd.f32 %v283, %v284
    %v286 = vsel %vm264, %v186, 0.0
    %v287 = vadd.f32 %v285, %v286
    %v288 = vsel %vm264, %v187, 0.0
    %v289 = vadd.f32 %v287, %v288
    %v290 = vsel %vm264, %v188, 0.0
    %v291 = vadd.f32 %v289, %v290
    %v292 = vsel %vm264, %v189, 0.0
    %v293 = vadd.f32 %v291, %v292
    %v294 = vsel %vm264, %v190, 0.0
    %v295 = vadd.f32 %v293, %v294
    %296 = vadd.xlane.f32.xlu0 %v295
    %v297 = vpop.xlane.xlu0 %296
    %v298 = vrot.slane %v297, 4
    %v299 = vadd.f32 %v297, %v298
    %v300 = vrot.slane %v299, 2
    %v301 = vadd.f32 %v299, %v300
    %v302 = vrot.slane %v301, 1
    %v303 = vadd.f32 %v301, %v302
    %s304 = vtos %v303
    %vm305 = vcmask 130048
    %v306 = vsel %vm305, %v248, 0.0
    %vm307 = vcmask 129024
    %v308 = vsel %vm307, %v249, 0.0
    %v309 = vadd.f32 %v306, %v308
    %v310 = vsel %vm305, %v250, 0.0
    %v311 = vadd.f32 %v309, %v310
    %v312 = vsel %vm307, %v251, 0.0
    %v313 = vadd.f32 %v311, %v312
    %v314 = vsel %vm305, %v252, 0.0
    %v315 = vadd.f32 %v313, %v314
    %v316 = vsel %vm307, %v253, 0.0
    %v317 = vadd.f32 %v315, %v316
    %v318 = vsel %vm305, %v254, 0.0
    %v319 = vadd.f32 %v317, %v318
    %v320 = vsel %vm307, %v255, 0.0
    %v321 = vadd.f32 %v319, %v320
    %v322 = vsel %vm305, %v256, 0.0
    %v323 = vadd.f32 %v321, %v322
    %v324 = vsel %vm307, %v257, 0.0
    %v325 = vadd.f32 %v323, %v324
    %v326 = vsel %vm305, %v258, 0.0
    %v327 = vadd.f32 %v325, %v326
    %v328 = vsel %vm307, %v259, 0.0
    %v329 = vadd.f32 %v327, %v328
    %v330 = vsel %vm305, %v260, 0.0
    %v331 = vadd.f32 %v329, %v330
    %v332 = vsel %vm307, %v261, 0.0
    %v333 = vadd.f32 %v331, %v332
    %v334 = vsel %vm305, %v262, 0.0
    %v335 = vadd.f32 %v333, %v334
    %v336 = vsel %vm307, %v263, 0.0
    %v337 = vadd.f32 %v335, %v336
    %338 = vadd.xlane.f32.xlu0 %v337
    %v339 = vpop.xlane.xlu0 %338
    %v340 = vrot.slane %v339, 4
    %v341 = vadd.f32 %v339, %v340
    %v342 = vrot.slane %v341, 2
    %v343 = vadd.f32 %v341, %v342
    %v344 = vrot.slane %v343, 1
    %v345 = vadd.f32 %v343, %v344
    %s346 = vtos %v345
    %v347 = vstv %s304
    %348 = vst [vmem:[#allocation7] sm:$0x1] %v347
    %v349 = vstv %s346
    %350 = vst [vmem:[#allocation8] sm:$0x1] %v349
    // Predicated region
    $region18: #{tpu_custom_call.1} parent=1 // pred_check
      _
    $region19: #{tpu_custom_call.1} parent=1 // pred_check_branch
      %352 = sbr.rel (0) target = $region21
    $region20: #{tpu_custom_call.1} parent=1 // pred_region
      %354 = vsyncadd [#allocation4], 0
      %s356 = sshll.u32 [#allocation7], 4
      %s357 = int_to_ptr.vmem [resolvable:$true] %s356
      %s358 = sshll.u32 %s2, 4
      %s359 = int_to_ptr.hbm [resolvable:$true] %s358
      %361 = dma.vmem_to_hbm [thread:$0]  %s357, 16, %s359, [#allocation4]
    $region21: #{tpu_custom_call.1} parent=1 // pred_fallthru
      _
    // Predicated region
    $region22: #{tpu_custom_call.1} parent=1 // pred_check
      _
    $region23: #{tpu_custom_call.1} parent=1 // pred_check_branch
      %363 = sbr.rel (0) target = $region25
    $region24: #{tpu_custom_call.1} parent=1 // pred_region
      %365 = vsyncadd [#allocation9], 0
      %s367 = sshll.u32 [#allocation8], 4
      %s368 = int_to_ptr.vmem [resolvable:$true] %s367
      %s369 = sshll.u32 %s3, 4
      %s370 = int_to_ptr.hbm [resolvable:$true] %s369
      %372 = dma.vmem_to_hbm [thread:$0]  %s368, 16, %s370, [#allocation9]
    $region25: #{tpu_custom_call.1} parent=1 // pred_fallthru
      _
    // Predicated region
    $region26: #{tpu_custom_call.1} parent=1 // pred_check
      _
    $region27: #{tpu_custom_call.1} parent=1 // pred_check_branch
      %374 = sbr.rel (0) target = $region29
    $region28: #{tpu_custom_call.1} parent=1 // pred_region
      %376 = dma.done [#allocation4], 16
    $region29: #{tpu_custom_call.1} parent=1 // pred_fallthru
      _
    // Predicated region
    $region30: #{tpu_custom_call.1} parent=1 // pred_check
      _
    $region31: #{tpu_custom_call.1} parent=1 // pred_check_branch
      %378 = sbr.rel (0) target = $region33
    $region32: #{tpu_custom_call.1} parent=1 // pred_region
      %380 = dma.done [#allocation9], 16
    $region33: #{tpu_custom_call.1} parent=1 // pred_fallthru
      _
    %381 = vsyncpa [#allocation3], 1
    %382 = vsyncpa [#allocation6], 1
    %383 = vsyncpa [#allocation4], 1
    %384 = vsyncpa [#allocation9], 1

</llo_original>
